<compile_context>
chip_gen: v7x
topology: tpu7x:2x2x1
jax: 0.10.0
libtpu: 0.0.40
codegen_flags: <defaults>
</compile_context>

<pallas_src>
import functools

import jax
import jax.numpy as jnp
from jax.experimental import pallas as pl
from jax.experimental.pallas import tpu as pltpu


# --------------------------------------------------------------------------
# Kernels
# --------------------------------------------------------------------------
def _mean_pool_kernel(x_ref, mask_ref, o_ref):
    """Single-pass variant (whole S resident per grid step).

    x_ref:    [TB, S, TH]   hidden-state tile
    mask_ref: [TB, S, 1]    attention-mask tile (f32, 0/1)
    o_ref:    [TB, TH]      pooled output tile
    """
    x = x_ref[...].astype(jnp.float32)
    m = mask_ref[...].astype(jnp.float32)                 # [TB, S, 1]
    num = jnp.sum(x * m, axis=1)                          # [TB, TH]
    den = jnp.maximum(jnp.sum(m, axis=1), 1e-9)           # [TB, 1]  (torch.clamp)
    o_ref[...] = (num / den).astype(o_ref.dtype)


def _mean_pool_acc_kernel(x_ref, mask_ref, o_ref, acc_ref, den_ref,
                          *, seq_len, block_s):
    """Accumulator variant: grid = (B tiles, H tiles, S tiles), S axis last."""
    k = pl.program_id(2)

    @pl.when(k == 0)
    def _():
        acc_ref[...] = jnp.zeros_like(acc_ref)
        den_ref[...] = jnp.zeros_like(den_ref)

    x = x_ref[...].astype(jnp.float32)                    # [TB, TS, TH]
    m = mask_ref[...].astype(jnp.float32)                 # [TB, TS, 1]
    prod = x * m

    if seq_len % block_s != 0:
        # Last S tile is partial: padded rows hold undefined data -> zero them
        # so they never reach the accumulators.
        s_idx = jax.lax.broadcasted_iota(jnp.int32, m.shape, dimension=1)
        valid = (k * block_s + s_idx) < seq_len           # [TB, TS, 1]
        prod = jnp.where(valid, prod, 0.0)
        m = jnp.where(valid, m, 0.0)

    acc_ref[...] += jnp.sum(prod, axis=1)                 # [TB, TH]
    den_ref[...] += jnp.sum(m, axis=1)                    # [TB, 1]

    @pl.when(k == pl.num_programs(2) - 1)
    def _():
        den = jnp.maximum(den_ref[...], 1e-9)
        o_ref[...] = (acc_ref[...] / den).astype(o_ref.dtype)


# --------------------------------------------------------------------------
# Tiling helpers
# --------------------------------------------------------------------------
def _round_up(v, m):
    return -(-v // m) * m


def _tile_bytes(bb, bs, bh, x_item, out_item, n_s):
    """Approximate VMEM footprint of one grid step (double-buffered tiles)."""
    x_t = bb * _round_up(bs, 8) * _round_up(bh, 128) * x_item
    m_t = bb * _round_up(bs, 8) * 128 * 4          # (bb, bs, 1) f32, lane-padded
    o_t = _round_up(bb, 8) * _round_up(bh, 128) * out_item
    acc = 0
    if n_s > 1:
        acc = (_round_up(bb, 8) * _round_up(bh, 128) * 4
               + _round_up(bb, 8) * 128 * 4)
    return 2 * (x_t + m_t + o_t) + acc


# --------------------------------------------------------------------------
# Wrapper
# --------------------------------------------------------------------------
def mean_pooling(last_hidden_state, attention_mask, *,
                 vmem_budget_bytes=12 * 1024 * 1024):
    """Pallas MeanPooling.forward(last_hidden_state, attention_mask)."""
    B, S, H = last_hidden_state.shape
    assert attention_mask.shape == (B, S), attention_mask.shape

    x = last_hidden_state
    x_item = jnp.dtype(x.dtype).itemsize
    out_item = x_item

    # Mask shipped as (B, S, 1) f32 so the in-kernel H broadcast is a lane splat.
    mask3 = attention_mask.astype(jnp.float32)[:, :, None]

    # ---- block_h: lane-dense (multiple of 128) when H allows, else full H ----
    if H % 128 == 0 and H > 512:
        block_h = next(c for c in (512, 384, 256, 128) if H % c == 0)
    else:
        block_h = H

    # ---- block_s: full S if the minimal-batch tile fits, else tile S ----
    min_bb = B if B <= 8 else 8
    if _tile_bytes(min_bb, S, block_h, x_item, out_item, 1) <= vmem_budget_bytes:
        block_s = S
    else:
        block_s = 8
        while (block_s + 8 <= S and
               _tile_bytes(min_bb, block_s + 8, block_h, x_item, out_item, 2)
               <= vmem_budget_bytes):
            block_s += 8
    n_s = pl.cdiv(S, block_s)

    # ---- block_b: largest batch tile (multiple of 8, or full B) in budget ----
    if B <= 8:
        block_b = B
    else:
        block_b = 8
        while (block_b + 8 <= B and
               _tile_bytes(block_b + 8, block_s, block_h, x_item, out_item, n_s)
               <= vmem_budget_bytes):
            block_b += 8

    # v7x: two TensorCores share the 'parallel' axes -> aim for >=2 steps.
    if B > 8 and pl.cdiv(B, block_b) * pl.cdiv(H, block_h) < 2:
        half = _round_up(block_b // 2, 8)
        if 8 <= half < block_b:
            block_b = half

    n_b = pl.cdiv(B, block_b)
    n_h = pl.cdiv(H, block_h)

    cost = pl.CostEstimate(
        flops=2 * B * S * H,
        transcendentals=0,
        bytes_accessed=(B * S * H * x_item          # x read once
                        + n_h * B * S * 4           # mask re-fetched per H tile
                        + B * H * out_item),        # output written once
    )
    compiler_params = pltpu.CompilerParams(
        dimension_semantics=(("parallel", "parallel", "arbitrary") if n_s > 1
                             else ("parallel", "parallel")),
        vmem_limit_bytes=int(min(max(32 << 20, vmem_budget_bytes + (8 << 20)),
                                 100 << 20)),
    )
    out_shape = jax.ShapeDtypeStruct((B, H), x.dtype)

    if n_s == 1:
        # Whole sequence resident per step: no accumulator needed.
        return pl.pallas_call(
            _mean_pool_kernel,
            grid=(n_b, n_h),
            in_specs=[
                pl.BlockSpec((block_b, S, block_h), lambda i, j: (i, 0, j)),
                pl.BlockSpec((block_b, S, 1), lambda i, j: (i, 0, 0)),
            ],
            out_specs=pl.BlockSpec((block_b, block_h), lambda i, j: (i, j)),
            out_shape=out_shape,
            compiler_params=compiler_params,
            cost_estimate=cost,
        )(x, mask3)

    # Long-sequence path: reduce over S tiles with f32 scratch accumulators.
    kernel = functools.partial(_mean_pool_acc_kernel,
                               seq_len=S, block_s=block_s)
    return pl.pallas_call(
        kernel,
        grid=(n_b, n_h, n_s),
        in_specs=[
            pl.BlockSpec((block_b, block_s, block_h), lambda i, j, k: (i, k, j)),
            pl.BlockSpec((block_b, block_s, 1), lambda i, j, k: (i, k, 0)),
        ],
        out_specs=pl.BlockSpec((block_b, block_h), lambda i, j, k: (i, j)),
        out_shape=out_shape,
        scratch_shapes=[
            pltpu.VMEM((block_b, block_h), jnp.float32),   # sum_embeddings acc
            pltpu.VMEM((block_b, 1), jnp.float32),         # sum_mask acc
        ],
        compiler_params=compiler_params,
        cost_estimate=cost,
    )(x, mask3)


# --------------------------------------------------------------------------
# Self-test
# --------------------------------------------------------------------------
if __name__ == "__main__":
    def reference(x, mask):
        m = mask.astype(jnp.float32)[:, :, None]
        num = jnp.sum(x.astype(jnp.float32) * m, axis=1)
        den = jnp.maximum(jnp.sum(m, axis=1), 1e-9)
        return (num / den).astype(x.dtype)

    key = jax.random.PRNGKey(0)
    k1, k2 = jax.random.split(key)

    # Small shape consistent with the module: batch=2, seq=8, hidden=32.
    B, S, H = 2, 8, 32
    x = jax.random.normal(k1, (B, S, H), dtype=jnp.float32)
    mask = jnp.ones((B, S), jnp.int32).at[1, 5:].set(0)   # row 1 tail is padding

    out = jax.block_until_ready(mean_pooling(x, mask))
    ref = reference(x, mask)
    assert out.shape == (B, H), out.shape
    assert bool(jnp.all(jnp.isfinite(out)))
    assert bool(jnp.allclose(out, ref, atol=1e-5, rtol=1e-5))

    # Exercise the tiled path (H-parallel grid + S-reduction accumulator with
    # partial-block masking) by forcing a deliberately tiny VMEM budget.
    B2, S2, H2 = 16, 128, 256
    xb = jax.random.normal(k2, (B2, S2, H2), dtype=jnp.float32)
    lens = (jnp.arange(B2) * 7 + 3) % (S2 + 1)
    maskb = (jnp.arange(S2)[None, :] < lens[:, None]).astype(jnp.int32)

    outb = jax.block_until_ready(
        mean_pooling(xb, maskb, vmem_budget_bytes=1 << 20))
    refb = reference(xb, maskb)
    assert outb.shape == (B2, H2), outb.shape
    assert bool(jnp.allclose(outb, refb, atol=1e-4, rtol=1e-4))

    print("KERNEL_OK")
</pallas_src>

<mosaic_0001>
module attributes {stable_mosaic.version = 11 : i64} {
  func.func @_mean_pool_kernel(%arg0: i32, %arg1: i32, %arg2: memref<2x8x32xf32, #tpu.memory_space<vmem>>, %arg3: memref<2x8x1xf32, #tpu.memory_space<vmem>>, %arg4: memref<2x32xf32, #tpu.memory_space<vmem>>) attributes {dimension_semantics = [#tpu.dimension_semantics<parallel>, #tpu.dimension_semantics<parallel>], iteration_bounds = array<i64: 1, 1>, scalar_prefetch = 0 : i64, scratch_operands = 0 : i64, tpu.core_type = #tpu.core_type<tc>, window_params = [{transform_indices = @transform_0, window_bounds = array<i64: 2, 8, 32>}, {transform_indices = @transform_1, window_bounds = array<i64: 2, 8, 1>}, {transform_indices = @transform_2, window_bounds = array<i64: 2, 32>}]} {
    %c0 = arith.constant 0 : index
    %c0_0 = arith.constant 0 : index
    %c0_1 = arith.constant 0 : index
    %0 = vector.load %arg2[%c0, %c0_0, %c0_1] : memref<2x8x32xf32, #tpu.memory_space<vmem>>, vector<2x8x32xf32>
    %c0_2 = arith.constant 0 : index
    %c0_3 = arith.constant 0 : index
    %c0_4 = arith.constant 0 : index
    %1 = vector.load %arg3[%c0_2, %c0_3, %c0_4] : memref<2x8x1xf32, #tpu.memory_space<vmem>>, vector<2x8x1xf32>
    %2 = vector.broadcast %1 : vector<2x8x1xf32> to vector<2x8x32xf32>
    %3 = arith.mulf %0, %2 : vector<2x8x32xf32>
    %cst = arith.constant dense<0.000000e+00> : vector<2x32xf32>
    %4 = vector.multi_reduction <add>, %3, %cst [1] : vector<2x8x32xf32> to vector<2x32xf32>
    %cst_5 = arith.constant dense<0.000000e+00> : vector<2x1xf32>
    %5 = vector.multi_reduction <add>, %1, %cst_5 [1] : vector<2x8x1xf32> to vector<2x1xf32>
    %cst_6 = arith.constant 9.99999971E-10 : f32
    %6 = vector.broadcast %cst_6 : f32 to vector<2x1xf32>
    %7 = arith.maximumf %5, %6 : vector<2x1xf32>
    %8 = vector.broadcast %7 : vector<2x1xf32> to vector<2x32xf32>
    %9 = arith.divf %4, %8 : vector<2x32xf32>
    %c0_7 = arith.constant 0 : index
    %c0_8 = arith.constant 0 : index
    %10 = vector.load %arg4[%c0_7, %c0_8] : memref<2x32xf32, #tpu.memory_space<vmem>>, vector<2x32xf32>
    tpu.vector_store %arg4[%c0_7, %c0_8], %9 {strides = array<i32>} : memref<2x32xf32, #tpu.memory_space<vmem>>, vector<2x32xf32>,
    return
  }
  func.func @transform_0(%arg0: i32, %arg1: i32) -> (i32, i32, i32) {
    %c0_i32 = arith.constant 0 : i32
    %c0_i32_0 = arith.constant 0 : i32
    return %arg0, %c0_i32, %arg1 : i32, i32, i32
  }
  func.func @transform_1(%arg0: i32, %arg1: i32) -> (i32, i32, i32) {
    %c0_i32 = arith.constant 0 : i32
    %c0_i32_0 = arith.constant 0 : i32
    %c0_i32_1 = arith.constant 0 : i32
    return %arg0, %c0_i32, %c0_i32_0 : i32, i32, i32
  }
  func.func @transform_2(%arg0: i32, %arg1: i32) -> (i32, i32) {
    %c0_i32 = arith.constant 0 : i32
    return %arg0, %arg1 : i32, i32
  }
}

</mosaic_0001>

<llo_original>
// kernel: tpu_custom_call.1
$region0: #{tpu_custom_call.1}
  #allocation0 [shape = 'u32[]', space=smem, size = 0x4, offset = 0x4, fixed_abs, tag = 'smem constant byte address 0x4 - core index']
  #allocation1 [shape = 'u32[144,128]{1,0:T(1,128)}', space=vmem, size = 0x12000, scoped, tag = 'internal scratch']
  %s0 = inlined_call_operand.vmem [shape: f32[2,8,32], index: 0, kind: input, shape index: {}]
  %s1 = inlined_call_operand.vmem [shape: f32[2,8,1], index: 1, kind: input, shape index: {}]
  %s2 = inlined_call_operand.hbm [shape: f32[2,32], index: 2, kind: output, shape index: {}]
  %s3 = sld [smem:[#allocation0]]
  $region18: #{tpu_custom_call.1} parent=0
    _
  %s5 = ssub.s32 1, %s3
  %s6 = scalar_select 0, %s5, %s3
  $region1: #{tpu_custom_call.1} parent=0
    #allocation2 [shape = 'u8[1024]{0}', space=vmem, size = 0x400, scoped, tag = 'output window, operand 0, single buffered']
    #allocation3 [shape = 's32[1]{0}', space=sflag, size = 0x4, scoped, tag = 'scoped memory for tpu_custom_call.1']
    %7 = vsyncpa [#allocation3], 0
    // Predicated region
    $region2: #{tpu_custom_call.1} parent=1 // pred_check
      _
    $region3: #{tpu_custom_call.1} parent=1 // pred_check_branch
      %9 = sbr.rel (0) target = $region5
    $region4: #{tpu_custom_call.1} parent=1 // pred_region
      _
    $region5: #{tpu_custom_call.1} parent=1 // pred_fallthru
      _
    // Predicated region
    $region6: #{tpu_custom_call.1} parent=1 // pred_check
      _
    $region7: #{tpu_custom_call.1} parent=1 // pred_check_branch
      %11 = sbr.rel (0) target = $region9
    $region8: #{tpu_custom_call.1} parent=1 // pred_region
      _
    $region9: #{tpu_custom_call.1} parent=1 // pred_fallthru
      _
    %v12 = vld [vmem:[%s0] sm:$0xff]
    %v13 = vld [vmem:[%s0 + $0x8] sm:$0xff]
    %v14 = vld [vmem:[%s1] sm:$0xff]
    %v15 = vld [vmem:[%s1 + $0x8] sm:$0xff]
    %17 = vset.pattern.permute.xlu0 0
    %18 = vperm.xlu0 %17, %v14
    %v19 = vpop.permute.xlu0 %18
    %22 = vset.pattern.permute.xlu0 0
    %23 = vperm.xlu0 %22, %v15
    %v24 = vpop.permute.xlu0 %23
    %v26 = vmul.f32 %v12, %v19
    %v27 = vmul.f32 %v13, %v24
    %vm28 = vcmask 261120
    %v29 = vsel %vm28, %v26, 0.0
    %v30 = vrot.slane %v29, 4
    %v31 = vadd.f32 %v29, %v30
    %v32 = vrot.slane %v31, 2
    %v33 = vadd.f32 %v31, %v32
    %v34 = vrot.slane %v33, 1
    %v35 = vadd.f32 %v33, %v34
    %v36 = vsel %vm28, %v27, 0.0
    %v37 = vrot.slane %v36, 4
    %v38 = vadd.f32 %v36, %v37
    %v39 = vrot.slane %v38, 2
    %v40 = vadd.f32 %v38, %v39
    %v41 = vrot.slane %v40, 1
    %v42 = vadd.f32 %v40, %v41
    %vm43 = vcmask 7168
    %v44 = vsel %vm43, %v14, 0.0
    %v45 = vrot.slane %v44, 4
    %v46 = vadd.f32 %v44, %v45
    %v47 = vrot.slane %v46, 2
    %v48 = vadd.f32 %v46, %v47
    %v49 = vrot.slane %v48, 1
    %v50 = vadd.f32 %v48, %v49
    %v51 = vsel %vm43, %v15, 0.0
    %v52 = vrot.slane %v51, 4
    %v53 = vadd.f32 %v51, %v52
    %v54 = vrot.slane %v53, 2
    %v55 = vadd.f32 %v53, %v54
    %v56 = vrot.slane %v55, 1
    %v57 = vadd.f32 %v55, %v56
    %v58 = vmax.f32 %v50, 1e-09
    %v59 = vmax.f32 %v57, 1e-09
    %61 = vset.pattern.permute.xlu0 0
    %62 = vperm.xlu0 %61, %v58
    %v63 = vpop.permute.xlu0 %62
    %66 = vset.pattern.permute.xlu0 0
    %67 = vperm.xlu0 %66, %v59
    %v68 = vpop.permute.xlu0 %67
    %v70 = vrcp.pop %v63
    %v71 = vmul.f32 %v35, %v70
    %v72 = vrcp.pop %v68
    %v73 = vmul.f32 %v42, %v72
    %vm76 = vcmask 1041409
    %v77 = vsel %vm76, %v73, %v71
    %vm79 = vcmask 254976
    %80 = vst.msk [vmem:[#allocation2] sm:$0x3] %vm79, %v77
    // Predicated region
    $region10: #{tpu_custom_call.1} parent=1 // pred_check
      _
    $region11: #{tpu_custom_call.1} parent=1 // pred_check_branch
      %82 = sbr.rel (0) target = $region13
    $region12: #{tpu_custom_call.1} parent=1 // pred_region
      %s84 = ssub.s32 32, 32
      %85 = vsyncadd [#allocation3], %s84
      %s87 = sshll.u32 [#allocation2], 4
      %s88 = int_to_ptr.vmem [resolvable:$true] %s87
      %90 = dma.vmem_to_hbm [thread:$0]  %s88, 32, %s2, [#allocation3]
    $region13: #{tpu_custom_call.1} parent=1 // pred_fallthru
      _
    // Predicated region
    $region14: #{tpu_custom_call.1} parent=1 // pred_check
      _
    $region15: #{tpu_custom_call.1} parent=1 // pred_check_branch
      %92 = sbr.rel (0) target = $region17
    $region16: #{tpu_custom_call.1} parent=1 // pred_region
      %93 = dma.done [#allocation3], 32
    $region17: #{tpu_custom_call.1} parent=1 // pred_fallthru
      _
    %94 = vsyncpa [#allocation3], 1

</llo_original>
